<compile_context>
chip_gen: v6e
topology: v6e:2x2x1
jax: 0.10.0
libtpu: 0.0.40
codegen_flags: <defaults>
</compile_context>

<pallas_src>
import jax
import jax.numpy as jnp
from jax.experimental import pallas as pl
from jax.experimental.pallas import tpu as pltpu

_LANES = 128                            # vreg lane width (last dim)
_TARGET_BLOCK_BYTES = 4 * 1024 * 1024   # ~4 MiB per VMEM buffer
_VMEM_LIMIT_BYTES = 32 * 1024 * 1024    # headroom for 2x double-buffered 4 MiB tiles


def binary_tanh_kernel(x_ref, o_ref):
    x = x_ref[...]
    one = jnp.ones((), dtype=o_ref.dtype)     # dtype-native constants (no f32 upcast)
    o_ref[...] = jnp.where(x >= 0, one, -one)


def binary_tanh(x):
    """BinaryTanh forward for an arbitrarily-shaped array via a lane-dense Pallas kernel."""
    orig_shape = x.shape
    dtype = x.dtype
    n = x.size
    if n == 0:
        return x

    itemsize = jnp.dtype(dtype).itemsize
    min_sublanes = max(8, 32 // itemsize)          # 8 (f32), 16 (bf16), 32 (8-bit)
    tile_cap = _TARGET_BLOCK_BYTES // (_LANES * itemsize)
    tile_cap = max(min_sublanes, (tile_cap // min_sublanes) * min_sublanes)

    flat = x.reshape(-1)
    padded = (n % _LANES) != 0
    if padded:
        # Only pad up to the next lane multiple (<=127 elements), never to tile_rows.
        pad_to = pl.cdiv(n, _LANES) * _LANES
        flat = jnp.pad(flat, (0, pad_to - n))
    rows = flat.shape[0] // _LANES
    x2d = flat.reshape(rows, _LANES)

    if rows <= tile_cap:
        tile_rows = rows        # single full-array block (divisibility constraint waived)
    else:
        tile_rows = tile_cap    # multiple of the dtype's sublane requirement
    num_tiles = pl.cdiv(rows, tile_rows)   # ragged last block handled by Pallas masking

    out2d = pl.pallas_call(
        binary_tanh_kernel,
        out_shape=jax.ShapeDtypeStruct((rows, _LANES), dtype),
        grid=(num_tiles,),
        in_specs=[pl.BlockSpec((tile_rows, _LANES), lambda i: (i, 0))],
        out_specs=pl.BlockSpec((tile_rows, _LANES), lambda i: (i, 0)),
        compiler_params=pltpu.CompilerParams(
            dimension_semantics=("parallel",),
            vmem_limit_bytes=_VMEM_LIMIT_BYTES,
        ),
    )(x2d)

    out = out2d.reshape(-1)
    if padded:
        out = out[:n]
    return out.reshape(orig_shape)


def reference_binary_tanh(x):
    h = jnp.clip(x, -1.0, 1.0)                              # nn.Hardtanh()
    return jnp.where(h >= 0, 1.0, -1.0).astype(x.dtype)     # BinarizeF.forward


if __name__ == "__main__":
    # Small 4D activation, consistent with an arbitrary-tensor elementwise module.
    batch, channels, height, width = 2, 4, 16, 16
    key = jax.random.PRNGKey(0)
    x = jax.random.normal(key, (batch, channels, height, width), dtype=jnp.float32)

    out = binary_tanh(x)
    out = jax.block_until_ready(out)

    ref = reference_binary_tanh(x)
    assert out.shape == x.shape
    assert out.dtype == x.dtype
    assert bool(jnp.all(out == ref))
    # Every output value is exactly +1 or -1.
    assert bool(jnp.all(jnp.abs(out) == 1.0))

    # Also check a shape whose numel is not a multiple of 128 (pad/slice fallback path)
    # and a shape large enough to use multiple grid tiles of the ragged kind.
    x_odd = jax.random.normal(jax.random.PRNGKey(1), (3, 5, 7), dtype=jnp.float32)
    out_odd = jax.block_until_ready(binary_tanh(x_odd))
    assert bool(jnp.all(out_odd == reference_binary_tanh(x_odd)))

    print("KERNEL_OK")
</pallas_src>

<mosaic_0001>
module attributes {stable_mosaic.version = 11 : i64} {
  func.func @binary_tanh_kernel(%arg0: i32, %arg1: memref<16x128xf32, #tpu.memory_space<vmem>>, %arg2: memref<16x128xf32, #tpu.memory_space<vmem>>) attributes {dimension_semantics = [#tpu.dimension_semantics<parallel>], iteration_bounds = array<i64: 1>, scalar_prefetch = 0 : i64, scratch_operands = 0 : i64, tpu.core_type = #tpu.core_type<tc>, window_params = [{transform_indices = @transform_0, window_bounds = array<i64: 16, 128>}, {transform_indices = @transform_1, window_bounds = array<i64: 16, 128>}]} {
    %c0 = arith.constant 0 : index
    %c0_0 = arith.constant 0 : index
    %0 = vector.load %arg1[%c0, %c0_0] : memref<16x128xf32, #tpu.memory_space<vmem>>, vector<16x128xf32>
    %cst = arith.constant 0.000000e+00 : f32
    %1 = vector.broadcast %cst : f32 to vector<16x128xf32>
    %2 = arith.cmpf oge, %0, %1 : vector<16x128xf32>
    %cst_1 = arith.constant 0.000000e+00 : f32
    %cst_2 = arith.constant 1.000000e+00 : f32
    %3 = arith.subf %cst_1, %cst_2 : f32
    %cst_3 = arith.constant 1.000000e+00 : f32
    %4 = vector.broadcast %cst_3 : f32 to vector<16x128xf32>
    %5 = vector.broadcast %3 : f32 to vector<16x128xf32>
    %6 = arith.select %2, %4, %5 : vector<16x128xi1>, vector<16x128xf32>
    %c0_4 = arith.constant 0 : index
    %c0_5 = arith.constant 0 : index
    %7 = vector.load %arg2[%c0_4, %c0_5] : memref<16x128xf32, #tpu.memory_space<vmem>>, vector<16x128xf32>
    tpu.vector_store %arg2[%c0_4, %c0_5], %6 {strides = array<i32>} : memref<16x128xf32, #tpu.memory_space<vmem>>, vector<16x128xf32>,
    return
  }
  func.func @transform_0(%arg0: i32) -> (i32, i32) {
    %c0_i32 = arith.constant 0 : i32
    %c0_i32_0 = arith.constant 0 : i32
    return %arg0, %c0_i32 : i32, i32
  }
  func.func @transform_1(%arg0: i32) -> (i32, i32) {
    %c0_i32 = arith.constant 0 : i32
    %c0_i32_0 = arith.constant 0 : i32
    return %arg0, %c0_i32 : i32, i32
  }
}

</mosaic_0001>

<llo_original>
// kernel: tpu_custom_call.1
$region0: #{tpu_custom_call.1}
  #allocation0 [shape = 'u32[]', space=smem, size = 0x4, offset = 0x4, fixed_abs, tag = 'smem constant byte address 0x4 - core index']
  #allocation1 [shape = 'u32[144,128]{1,0:T(1,128)}', space=vmem, size = 0x12000, scoped, tag = 'internal scratch']
  %s0 = inlined_call_operand.hbm [shape: f32[16,128], index: 0, kind: input, shape index: {}]
  %s1 = inlined_call_operand.hbm [shape: f32[16,128], index: 1, kind: output, shape index: {}]
  %s2 = sld [smem:[#allocation0]]
  $region18: #{tpu_custom_call.1} parent=0
    _
  %s4 = ssub.s32 1, %s2
  %s5 = scalar_select 0, %s4, %s2
  $region1: #{tpu_custom_call.1} parent=0
    #allocation2 [shape = 'u8[8192]{0}', space=vmem, size = 0x2000, scoped, tag = 'input window, operand 0, single buffered']
    #allocation3 [shape = 's32[1]{0}', space=sflag, size = 0x4, scoped, tag = 'scoped memory for tpu_custom_call.1']
    #allocation4 [shape = 's32[1]{0}', space=sflag, size = 0x4, scoped, tag = 'scoped memory for tpu_custom_call.1']
    #allocation5 [shape = 'u8[8192]{0}', space=vmem, size = 0x2000, scoped, tag = 'output window, operand 0, single buffered']
    %6 = vsyncpa [#allocation3], 0
    %7 = vsyncpa [#allocation4], 0
    // Predicated region
    $region2: #{tpu_custom_call.1} parent=1 // pred_check
      _
    $region3: #{tpu_custom_call.1} parent=1 // pred_check_branch
      %9 = sbr.rel (0) target = $region5
    $region4: #{tpu_custom_call.1} parent=1 // pred_region
      %s11 = ssub.s32 256, 256
      %12 = vsyncadd [#allocation3], %s11
      %s13 = sshll.u32 [#allocation2], 4
      %s14 = int_to_ptr.vmem [resolvable:$true] %s13
      %19 = dma.hbm_to_vmem [thread:$0]  %s0, 256, %s14, [#allocation3], 128, 128, 8
    $region5: #{tpu_custom_call.1} parent=1 // pred_fallthru
      _
    // Predicated region
    $region6: #{tpu_custom_call.1} parent=1 // pred_check
      _
    $region7: #{tpu_custom_call.1} parent=1 // pred_check_branch
      %21 = sbr.rel (0) target = $region9
    $region8: #{tpu_custom_call.1} parent=1 // pred_region
      %22 = dma.done [#allocation3], 256
    $region9: #{tpu_custom_call.1} parent=1 // pred_fallthru
      _
    %v23 = vld [vmem:[#allocation2] sm:$0xff]
    %v24 = vld [vmem:[#allocation2 + $0x8] sm:$0xff]
    %vm25 = vcmp.ge.f32.partialorder %v23, 0.0
    %vm26 = vcmp.ge.f32.partialorder %v24, 0.0
    %v27 = vsel %vm25, 1.0, -1.0
    %v28 = vsel %vm26, 1.0, -1.0
    %29 = vst [vmem:[#allocation5] sm:$0xff] %v27
    %30 = vst [vmem:[#allocation5 + $0x8] sm:$0xff] %v28
    // Predicated region
    $region10: #{tpu_custom_call.1} parent=1 // pred_check
      _
    $region11: #{tpu_custom_call.1} parent=1 // pred_check_branch
      %32 = sbr.rel (0) target = $region13
    $region12: #{tpu_custom_call.1} parent=1 // pred_region
      %s34 = ssub.s32 256, 256
      %35 = vsyncadd [#allocation4], %s34
      %s36 = sshll.u32 [#allocation5], 4
      %s37 = int_to_ptr.vmem [resolvable:$true] %s36
      %42 = dma.vmem_to_hbm [thread:$0]  %s37, 256, %s1, [#allocation4], 128, 128, 8
    $region13: #{tpu_custom_call.1} parent=1 // pred_fallthru
      _
    // Predicated region
    $region14: #{tpu_custom_call.1} parent=1 // pred_check
      _
    $region15: #{tpu_custom_call.1} parent=1 // pred_check_branch
      %44 = sbr.rel (0) target = $region17
    $region16: #{tpu_custom_call.1} parent=1 // pred_region
      %45 = dma.done [#allocation4], 256
    $region17: #{tpu_custom_call.1} parent=1 // pred_fallthru
      _
    %46 = vsyncpa [#allocation3], 1
    %47 = vsyncpa [#allocation4], 1

</llo_original>
